<compile_context>
chip_gen: v7x
topology: tpu7x:2x2x1
jax: 0.10.0
libtpu: 0.0.40
codegen_flags: <defaults>
</compile_context>

<pallas_src>
import jax
import jax.numpy as jnp
from jax.experimental import pallas as pl
from jax.experimental.pallas import tpu as pltpu

HIDDEN1 = 64
HIDDEN2 = 32
OUT = 1

_LANE = 128           # vreg lane width: last dim of every VMEM tile pads to this
_MIN_SPLIT_BATCH = 1024   # below this, don't bother splitting across TensorCores


def _round_up(n, m):
    return ((n + m - 1) // m) * m


def _pad_lane(n):
    return _round_up(n, _LANE)


# --------------------------------------------------------------------------- kernel
def _mlp_kernel(x_ref, w1_ref, b1_ref, w2_ref, b2_ref, w3r_ref, b3_ref, o_ref):
    x = x_ref[...]                                                       # (bt, F) f32
    # fc1 + ReLU: bf16 MXU inputs, f32 accumulation, f32 elementwise.
    h1 = jnp.dot(x.astype(jnp.bfloat16), w1_ref[...],
                 preferred_element_type=jnp.float32) + b1_ref[...]
    h1 = jnp.maximum(h1, 0.0)
    # fc2 + ReLU
    h2 = jnp.dot(h1.astype(jnp.bfloat16), w2_ref[...],
                 preferred_element_type=jnp.float32) + b2_ref[...]
    h2 = jnp.maximum(h2, 0.0)
    # fc3 (N=1): keep off the MXU -- VPU multiply + XLU lane reduction.
    z = jnp.sum(h2 * w3r_ref[...], axis=-1, keepdims=True) + b3_ref[...]
    o_ref[...] = jax.nn.sigmoid(z).astype(o_ref.dtype)


# --------------------------------------------------------------------------- wrapper
def outcome_predictor_forward(x, params, *, batch_tile=None):
    """x: (B, input_size) float32. Returns (B, 1) float32 probabilities."""
    w1, b1, w2, b2, w3, b3 = params
    B, F = x.shape
    assert w1.shape == (F, HIDDEN1)

    # Ship matmul weights as bf16 (resident in VMEM); fc3 weight as an f32 row for the VPU path.
    w1b = w1.astype(jnp.bfloat16)
    w2b = w2.astype(jnp.bfloat16)
    w3r = jnp.reshape(w3, (1, HIDDEN2)).astype(jnp.float32)

    # ---- hardware query (VMEM capacity; dual-TC proxy) --------------------
    try:
        info = pltpu.get_tpu_info()
        vmem_cap = int(getattr(info, "vmem_capacity_bytes", 64 << 20))
    except Exception:  # pragma: no cover - conservative fallback
        vmem_cap = 64 << 20
    num_tc = 2 if vmem_cap <= (64 << 20) else 1          # v7x: 64 MiB/TC, 2 TCs
    vmem_limit = int(min(vmem_cap * 3 // 4, 96 << 20))   # 48 MiB on v7x, 96 MiB on v5e/v6e

    # ---- per-row VMEM cost with 128-lane padding (f32 unless noted) -------
    row_bytes = (
        2 * _pad_lane(F) * 4          # x tile, double-buffered
        + 2 * _pad_lane(OUT) * 4      # out tile, double-buffered
        + _pad_lane(HIDDEN1) * 4      # h1 intermediate
        + _pad_lane(HIDDEN2) * 4      # h2 intermediate
        + _pad_lane(F) * 2            # bf16 copy of x at the fc1 dot
        + _pad_lane(HIDDEN1) * 2      # bf16 copy of h1 at the fc2 dot
    )
    headroom = 6 << 20                # compiler internal scratch + resident weights/biases
    budget = max(1 << 20, vmem_limit - headroom)
    bt_cap = max(16, (budget // row_bytes) // 16 * 16)

    # ---- choose the effective batch tile ----------------------------------
    if batch_tile is not None:
        bt = min(_round_up(min(batch_tile, B), 8), bt_cap)
        if bt > B:
            bt = B                    # single full-extent block
    else:
        bt = B if B <= bt_cap else bt_cap
        if num_tc >= 2 and B >= _MIN_SPLIT_BATCH:
            # Dual-TC chip: keep >=2 grid steps and make the step count even.
            steps = pl.cdiv(B, bt)
            if steps == 1:
                steps = 2
            elif steps % 2 == 1:
                steps += 1
            bt = min(bt_cap, max(16, _round_up(pl.cdiv(B, steps), 16)))

    grid_b = pl.cdiv(B, bt)           # partial final block handled by Pallas masking

    # ---- scheduler hint ----------------------------------------------------
    param_bytes = (F * HIDDEN1 + HIDDEN1 * HIDDEN2) * 2 + \
                  (HIDDEN1 + HIDDEN2 + HIDDEN2 + OUT) * 4
    flops = 2 * B * (F * HIDDEN1 + HIDDEN1 * HIDDEN2 + HIDDEN2 * OUT)
    cost = pl.CostEstimate(flops=int(flops),
                           transcendentals=int(B * OUT),
                           bytes_accessed=int(B * F * 4 + B * OUT * 4 + param_bytes))

    out = pl.pallas_call(
        _mlp_kernel,
        out_shape=jax.ShapeDtypeStruct((B, OUT), jnp.float32),
        grid_spec=pl.GridSpec(
            grid=(grid_b,),
            in_specs=[
                pl.BlockSpec((bt, F), lambda i: (i, 0)),              # x tile
                pl.BlockSpec((F, HIDDEN1), lambda i: (0, 0)),         # W1 (bf16, resident)
                pl.BlockSpec((1, HIDDEN1), lambda i: (0, 0)),         # b1
                pl.BlockSpec((HIDDEN1, HIDDEN2), lambda i: (0, 0)),   # W2 (bf16, resident)
                pl.BlockSpec((1, HIDDEN2), lambda i: (0, 0)),         # b2
                pl.BlockSpec((1, HIDDEN2), lambda i: (0, 0)),         # W3 as a row (f32)
                pl.BlockSpec((1, OUT), lambda i: (0, 0)),             # b3
            ],
            out_specs=pl.BlockSpec((bt, OUT), lambda i: (i, 0)),
        ),
        compiler_params=pltpu.CompilerParams(
            dimension_semantics=("parallel",),
            vmem_limit_bytes=vmem_limit,
        ),
        cost_estimate=cost,
    )(x, w1b, b1, w2b, b2, w3r, b3)
    return out


# --------------------------------------------------------------------------- params / reference
def init_params(key, input_size):
    """Init matching PyTorch nn.Linear's U(-1/sqrt(fan_in), +1/sqrt(fan_in)) scheme."""
    def linear(k, fan_in, fan_out):
        kw, kb = jax.random.split(k)
        bound = 1.0 / jnp.sqrt(fan_in)
        w = jax.random.uniform(kw, (fan_in, fan_out), jnp.float32, -bound, bound)
        b = jax.random.uniform(kb, (1, fan_out), jnp.float32, -bound, bound)
        return w, b

    k1, k2, k3 = jax.random.split(key, 3)
    w1, b1 = linear(k1, input_size, HIDDEN1)
    w2, b2 = linear(k2, HIDDEN1, HIDDEN2)
    w3, b3 = linear(k3, HIDDEN2, OUT)
    return (w1, b1, w2, b2, w3, b3)


def reference_forward(x, params):
    w1, b1, w2, b2, w3, b3 = params
    h1 = jnp.maximum(x @ w1 + b1, 0.0)
    h2 = jnp.maximum(h1 @ w2 + b2, 0.0)
    return jax.nn.sigmoid(h2 @ w3 + b3)


# --------------------------------------------------------------------------- self-test
if __name__ == "__main__":
    key = jax.random.PRNGKey(0)
    k_x, k_p, k_x2 = jax.random.split(key, 3)

    input_size = 16  # e.g. 16 patient features
    params = init_params(k_p, input_size)

    # bf16 MXU inputs (f32 accumulation): tolerance on sigmoid outputs loosened accordingly.
    TOL = 2e-2

    # Small case (single full-extent block).
    batch = 8
    x = jax.random.normal(k_x, (batch, input_size), dtype=jnp.float32)
    out = jax.block_until_ready(outcome_predictor_forward(x, params))
    ref = reference_forward(x, params)
    assert out.shape == (batch, 1)
    assert jnp.allclose(out, ref, atol=TOL), "mismatch vs reference (small)"

    # Multi-step grid with a partial final block (forced small tile: 300 = 2*128 + 44).
    batch2 = 300
    x2 = jax.random.normal(k_x2, (batch2, input_size), dtype=jnp.float32)
    out2 = jax.block_until_ready(outcome_predictor_forward(x2, params, batch_tile=128))
    ref2 = reference_forward(x2, params)
    assert out2.shape == (batch2, 1)
    assert jnp.allclose(out2, ref2, atol=TOL), "mismatch vs reference (partial block)"

    # Auto-sized tile path (single block here; exercises the VMEM-budget sizing code).
    out3 = jax.block_until_ready(outcome_predictor_forward(x2, params))
    assert out3.shape == (batch2, 1)
    assert jnp.allclose(out3, ref2, atol=TOL), "mismatch vs reference (auto tile)"

    print("KERNEL_OK")
</pallas_src>

<mosaic_0001>
module attributes {stable_mosaic.version = 11 : i64} {
  func.func @_mlp_kernel(%arg0: i32, %arg1: memref<8x16xf32, #tpu.memory_space<vmem>>, %arg2: memref<16x64xbf16, #tpu.memory_space<vmem>>, %arg3: memref<1x64xf32, #tpu.memory_space<vmem>>, %arg4: memref<64x32xbf16, #tpu.memory_space<vmem>>, %arg5: memref<1x32xf32, #tpu.memory_space<vmem>>, %arg6: memref<1x32xf32, #tpu.memory_space<vmem>>, %arg7: memref<1x1xf32, #tpu.memory_space<vmem>>, %arg8: memref<8x1xf32, #tpu.memory_space<vmem>>) attributes {dimension_semantics = [#tpu.dimension_semantics<parallel>], iteration_bounds = array<i64: 1>, scalar_prefetch = 0 : i64, scratch_operands = 0 : i64, tpu.core_type = #tpu.core_type<tc>, window_params = [{transform_indices = @transform_0, window_bounds = array<i64: 8, 16>}, {pipeline_mode = #tpu.pipeline_mode<synchronous>, transform_indices = @transform_1, window_bounds = array<i64: 16, 64>}, {pipeline_mode = #tpu.pipeline_mode<synchronous>, transform_indices = @transform_2, window_bounds = array<i64: 1, 64>}, {pipeline_mode = #tpu.pipeline_mode<synchronous>, transform_indices = @transform_3, window_bounds = array<i64: 64, 32>}, {pipeline_mode = #tpu.pipeline_mode<synchronous>, transform_indices = @transform_4, window_bounds = array<i64: 1, 32>}, {pipeline_mode = #tpu.pipeline_mode<synchronous>, transform_indices = @transform_5, window_bounds = array<i64: 1, 32>}, {pipeline_mode = #tpu.pipeline_mode<synchronous>, transform_indices = @transform_6, window_bounds = array<i64: 1, 1>}, {transform_indices = @transform_7, window_bounds = array<i64: 8, 1>}]} {
    %c0 = arith.constant 0 : index
    %c0_0 = arith.constant 0 : index
    %0 = vector.load %arg1[%c0, %c0_0] : memref<8x16xf32, #tpu.memory_space<vmem>>, vector<8x16xf32>
    %1 = arith.truncf %0 : vector<8x16xf32> to vector<8x16xbf16>
    %c0_1 = arith.constant 0 : index
    %c0_2 = arith.constant 0 : index
    %2 = vector.load %arg2[%c0_1, %c0_2] : memref<16x64xbf16, #tpu.memory_space<vmem>>, vector<16x64xbf16>
    %cst = arith.constant dense<0.000000e+00> : vector<8x64xf32>
    %3 = tpu.matmul %1, %2, %cst {dimension_numbers = #tpu.dot_dimension_numbers<[1], [0], [0], [1], [0, 0, 1, 1], [], []>} : vector<8x16xbf16>, vector<16x64xbf16>, vector<8x64xf32> -> vector<8x64xf32>
    %c0_3 = arith.constant 0 : index
    %c0_4 = arith.constant 0 : index
    %4 = vector.load %arg3[%c0_3, %c0_4] : memref<1x64xf32, #tpu.memory_space<vmem>>, vector<1x64xf32>
    %5 = vector.broadcast %4 : vector<1x64xf32> to vector<8x64xf32>
    %6 = arith.addf %3, %5 : vector<8x64xf32>
    %cst_5 = arith.constant 0.000000e+00 : f32
    %7 = vector.broadcast %cst_5 : f32 to vector<8x64xf32>
    %8 = arith.maximumf %6, %7 : vector<8x64xf32>
    %9 = arith.truncf %8 : vector<8x64xf32> to vector<8x64xbf16>
    %c0_6 = arith.constant 0 : index
    %c0_7 = arith.constant 0 : index
    %10 = vector.load %arg4[%c0_6, %c0_7] : memref<64x32xbf16, #tpu.memory_space<vmem>>, vector<64x32xbf16>
    %cst_8 = arith.constant dense<0.000000e+00> : vector<8x32xf32>
    %11 = tpu.matmul %9, %10, %cst_8 {dimension_numbers = #tpu.dot_dimension_numbers<[1], [0], [0], [1], [0, 0, 1, 1], [], []>} : vector<8x64xbf16>, vector<64x32xbf16>, vector<8x32xf32> -> vector<8x32xf32>
    %c0_9 = arith.constant 0 : index
    %c0_10 = arith.constant 0 : index
    %12 = vector.load %arg5[%c0_9, %c0_10] : memref<1x32xf32, #tpu.memory_space<vmem>>, vector<1x32xf32>
    %13 = vector.broadcast %12 : vector<1x32xf32> to vector<8x32xf32>
    %14 = arith.addf %11, %13 : vector<8x32xf32>
    %cst_11 = arith.constant 0.000000e+00 : f32
    %15 = vector.broadcast %cst_11 : f32 to vector<8x32xf32>
    %16 = arith.maximumf %14, %15 : vector<8x32xf32>
    %c0_12 = arith.constant 0 : index
    %c0_13 = arith.constant 0 : index
    %17 = vector.load %arg6[%c0_12, %c0_13] : memref<1x32xf32, #tpu.memory_space<vmem>>, vector<1x32xf32>
    %18 = vector.broadcast %17 : vector<1x32xf32> to vector<8x32xf32>
    %19 = arith.mulf %16, %18 : vector<8x32xf32>
    %cst_14 = arith.constant dense<0.000000e+00> : vector<8xf32>
    %20 = vector.multi_reduction <add>, %19, %cst_14 [1] : vector<8x32xf32> to vector<8xf32>
    %21 = vector.shape_cast %20 : vector<8xf32> to vector<8x1xf32>
    %c0_15 = arith.constant 0 : index
    %c0_16 = arith.constant 0 : index
    %22 = vector.load %arg7[%c0_15, %c0_16] : memref<1x1xf32, #tpu.memory_space<vmem>>, vector<1x1xf32>
    %23 = vector.broadcast %22 : vector<1x1xf32> to vector<8x1xf32>
    %24 = arith.addf %21, %23 : vector<8x1xf32>
    %25 = arith.negf %24 : vector<8x1xf32>
    %26 = math.exp %25 : vector<8x1xf32>
    %cst_17 = arith.constant 1.000000e+00 : f32
    %27 = vector.broadcast %cst_17 : f32 to vector<8x1xf32>
    %28 = arith.addf %27, %26 : vector<8x1xf32>
    %29 = arith.divf %27, %28 : vector<8x1xf32>
    %c0_18 = arith.constant 0 : index
    %c0_19 = arith.constant 0 : index
    %30 = vector.load %arg8[%c0_18, %c0_19] : memref<8x1xf32, #tpu.memory_space<vmem>>, vector<8x1xf32>
    tpu.vector_store %arg8[%c0_18, %c0_19], %29 {strides = array<i32>} : memref<8x1xf32, #tpu.memory_space<vmem>>, vector<8x1xf32>,
    return
  }
  func.func @transform_0(%arg0: i32) -> (i32, i32) {
    %c0_i32 = arith.constant 0 : i32
    %c0_i32_0 = arith.constant 0 : i32
    return %arg0, %c0_i32 : i32, i32
  }
  func.func @transform_1(%arg0: i32) -> (i32, i32) {
    %c0_i32 = arith.constant 0 : i32
    %c0_i32_0 = arith.constant 0 : i32
    %c0_i32_1 = arith.constant 0 : i32
    return %c0_i32, %c0_i32_0 : i32, i32
  }
  func.func @transform_2(%arg0: i32) -> (i32, i32) {
    %c0_i32 = arith.constant 0 : i32
    %c0_i32_0 = arith.constant 0 : i32
    %c0_i32_1 = arith.constant 0 : i32
    return %c0_i32, %c0_i32_0 : i32, i32
  }
  func.func @transform_3(%arg0: i32) -> (i32, i32) {
    %c0_i32 = arith.constant 0 : i32
    %c0_i32_0 = arith.constant 0 : i32
    %c0_i32_1 = arith.constant 0 : i32
    return %c0_i32, %c0_i32_0 : i32, i32
  }
  func.func @transform_4(%arg0: i32) -> (i32, i32) {
    %c0_i32 = arith.constant 0 : i32
    %c0_i32_0 = arith.constant 0 : i32
    %c0_i32_1 = arith.constant 0 : i32
    return %c0_i32, %c0_i32_0 : i32, i32
  }
  func.func @transform_5(%arg0: i32) -> (i32, i32) {
    %c0_i32 = arith.constant 0 : i32
    %c0_i32_0 = arith.constant 0 : i32
    %c0_i32_1 = arith.constant 0 : i32
    return %c0_i32, %c0_i32_0 : i32, i32
  }
  func.func @transform_6(%arg0: i32) -> (i32, i32) {
    %c0_i32 = arith.constant 0 : i32
    %c0_i32_0 = arith.constant 0 : i32
    %c0_i32_1 = arith.constant 0 : i32
    return %c0_i32, %c0_i32_0 : i32, i32
  }
  func.func @transform_7(%arg0: i32) -> (i32, i32) {
    %c0_i32 = arith.constant 0 : i32
    %c0_i32_0 = arith.constant 0 : i32
    return %arg0, %c0_i32 : i32, i32
  }
}

</mosaic_0001>

<llo_original>
// kernel: tpu_custom_call.1
$region0: #{tpu_custom_call.1}
  #allocation0 [shape = 'u32[]', space=smem, size = 0x4, offset = 0x4, fixed_abs, tag = 'smem constant byte address 0x4 - core index']
  #allocation1 [shape = 'u32[144,128]{1,0:T(1,128)}', space=vmem, size = 0x12000, scoped, tag = 'internal scratch']
  #allocation2 [shape = 'f32[1,1]{1,0:T(1,128)S(1)}', space=vmem, size = 0x200, scoped, tag = 'scoped memory for tpu_custom_call.1']
  %s0 = inlined_call_operand.vmem [shape: f32[8,16], index: 0, kind: input, shape index: {}]
  %s1 = inlined_call_operand.vmem [shape: bf16[16,64], index: 1, kind: input, shape index: {}]
  %s2 = inlined_call_operand.vmem [shape: f32[1,64], index: 2, kind: input, shape index: {}]
  %s3 = inlined_call_operand.vmem [shape: bf16[64,32], index: 3, kind: input, shape index: {}]
  %s4 = inlined_call_operand.vmem [shape: f32[1,32], index: 4, kind: input, shape index: {}]
  %s5 = inlined_call_operand.vmem [shape: f32[1,32], index: 5, kind: input, shape index: {}]
  %s6 = inlined_call_operand.<no memory space> [shape: f32[1,1], index: 6, kind: input, shape index: {}]
  %s7 = inlined_call_operand.vmem [shape: f32[8,1], index: 7, kind: output, shape index: {}]
  %s8 = sld [smem:[#allocation0]]
  $region38: #{tpu_custom_call.1} parent=0
    _
  %s10 = ssub.s32 1, %s8
  %s11 = scalar_select 0, %s10, %s8
  %v12 = vstv %s6
  %13 = vst [vmem:[#allocation2] sm:$0x1] %v12
  // Predicated region
  $region2: #{tpu_custom_call.1} parent=0 // pred_check
    _
  $region3: #{tpu_custom_call.1} parent=0 // pred_check_branch
    %15 = sbr.rel (0) target = $region5
  $region4: #{tpu_custom_call.1} parent=0 // pred_region
    _
  $region5: #{tpu_custom_call.1} parent=0 // pred_fallthru
    _
  // Predicated region
  $region6: #{tpu_custom_call.1} parent=0 // pred_check
    _
  $region7: #{tpu_custom_call.1} parent=0 // pred_check_branch
    %17 = sbr.rel (0) target = $region9
  $region8: #{tpu_custom_call.1} parent=0 // pred_region
    _
  $region9: #{tpu_custom_call.1} parent=0 // pred_fallthru
    _
  // Predicated region
  $region10: #{tpu_custom_call.1} parent=0 // pred_check
    _
  $region11: #{tpu_custom_call.1} parent=0 // pred_check_branch
    %19 = sbr.rel (0) target = $region13
  $region12: #{tpu_custom_call.1} parent=0 // pred_region
    _
  $region13: #{tpu_custom_call.1} parent=0 // pred_fallthru
    _
  // Predicated region
  $region14: #{tpu_custom_call.1} parent=0 // pred_check
    _
  $region15: #{tpu_custom_call.1} parent=0 // pred_check_branch
    %21 = sbr.rel (0) target = $region17
  $region16: #{tpu_custom_call.1} parent=0 // pred_region
    _
  $region17: #{tpu_custom_call.1} parent=0 // pred_fallthru
    _
  // Predicated region
  $region18: #{tpu_custom_call.1} parent=0 // pred_check
    _
  $region19: #{tpu_custom_call.1} parent=0 // pred_check_branch
    %23 = sbr.rel (0) target = $region21
  $region20: #{tpu_custom_call.1} parent=0 // pred_region
    _
  $region21: #{tpu_custom_call.1} parent=0 // pred_fallthru
    _
  // Predicated region
  $region22: #{tpu_custom_call.1} parent=0 // pred_check
    _
  $region23: #{tpu_custom_call.1} parent=0 // pred_check_branch
    %25 = sbr.rel (0) target = $region25
  $region24: #{tpu_custom_call.1} parent=0 // pred_region
    _
  $region25: #{tpu_custom_call.1} parent=0 // pred_fallthru
    _
  // Predicated region
  $region26: #{tpu_custom_call.1} parent=0 // pred_check
    _
  $region27: #{tpu_custom_call.1} parent=0 // pred_check_branch
    %27 = sbr.rel (0) target = $region29
  $region28: #{tpu_custom_call.1} parent=0 // pred_region
    _
  $region29: #{tpu_custom_call.1} parent=0 // pred_fallthru
    _
  %v29 = vld [vmem:[%s0] sm:$0xff]
  %v30 = vpack.c.bf16 %v29, %v29
  %v31 = vld [vmem:[%s1] sm:$0xf]
  %v32 = vld [vmem:[%s1 + $0x4] sm:$0xf]
  %v33 = vld [vmem:[%s2] sm:$0x1]
  %v35 = vlaneseq
  %v36 = vshrl.u32 %v35, 7
  %v37 = vsub.s32 0, %v36
  %v38 = vrot.slane %v33, %v37
  %v42 = vunpack.c.l.b16 %v31
  %v43 = vunpack.c.l.b16 %v32
  %v44 = vpack.c.b16 %v43, %v42
  %vm46 = vcmask 130048
  %v48 = vsel %vm46, %v30, 0
  %50 = vmatprep.subr.bf16.mxu0 0
  %51 = vmatpush1.bf16.msra.mxu0 %v44
  %52 = vmatprep.subr.bf16.mxu0 0
  %53 = vmatpush1.bf16.msra.mxu0 0
  %54 = vmatprep.subr.bf16.mxu0 0
  %55 = vmatpush1.bf16.msra.mxu0 0
  %56 = vmatprep.subr.bf16.mxu0 0
  %57 = vmatpush1.bf16.msra.mxu0 0
  %58 = vmatprep.subr.bf16.mxu0 0
  %59 = vmatpush1.bf16.msra.mxu0 0
  %60 = vmatprep.subr.bf16.mxu0 0
  %61 = vmatpush1.bf16.msra.mxu0 0
  %62 = vmatprep.subr.bf16.mxu0 0
  %63 = vmatpush1.bf16.msra.mxu0 0
  %64 = vmatprep.subr.bf16.mxu0 0
  %65 = vmatpush1.bf16.msra.mxu0 0
  %66 = vmatprep.subr.bf16.mxu0 0
  %67 = vmatpush1.bf16.msra.mxu0 0
  %68 = vmatprep.subr.bf16.mxu0 0
  %69 = vmatpush1.bf16.msra.mxu0 0
  %70 = vmatprep.subr.bf16.mxu0 0
  %71 = vmatpush1.bf16.msra.mxu0 0
  %72 = vmatprep.subr.bf16.mxu0 0
  %73 = vmatpush1.bf16.msra.mxu0 0
  %74 = vmatprep.subr.bf16.mxu0 0
  %75 = vmatpush1.bf16.msra.mxu0 0
  %76 = vmatprep.subr.bf16.mxu0 0
  %77 = vmatpush1.bf16.msra.mxu0 0
  %78 = vmatprep.subr.bf16.mxu0 0
  %79 = vmatpush1.bf16.msra.mxu0 0
  %80 = vmatprep.subr.bf16.mxu0 0
  %81 = vmatpush1.bf16.msra.mxu0 0
  %82 = vmatprep.mubr.bf16.mxu0 0
  %83 = vmatmul.mubr.bf16.gmra.mrb[0].mxu0 %v48
  %v84 = vpop.f32.mrb[0].mxu0
  %v85 = vadd.f32 %v38, %v84
  %v86 = vpop.f32.mrb[0].mxu0
  %v87 = vpop.f32.mrb[0].mxu0
  %v88 = vpop.f32.mrb[0].mxu0
  %89 = vdwg.mxu0
  %v90 = vmax.f32 %v85, 0.0
  %v91 = vpack.c.bf16 %v90, %v90
  %v92 = vld [vmem:[%s3] sm:$0xf]
  %v93 = vld [vmem:[%s3 + $0x4] sm:$0xf]
  %v94 = vld [vmem:[%s3 + $0x8] sm:$0xf]
  %v95 = vld [vmem:[%s3 + $0xc] sm:$0xf]
  %v96 = vld [vmem:[%s3 + $0x10] sm:$0xf]
  %v97 = vld [vmem:[%s3 + $0x14] sm:$0xf]
  %v98 = vld [vmem:[%s3 + $0x18] sm:$0xf]
  %v99 = vld [vmem:[%s3 + $0x1c] sm:$0xf]
  %v100 = vld [vmem:[%s4] sm:$0x1]
  %v102 = vlaneseq
  %v103 = vshrl.u32 %v102, 7
  %v104 = vsub.s32 0, %v103
  %v105 = vrot.slane %v100, %v104
  %v115 = vunpack.c.l.b16 %v92
  %v116 = vunpack.c.l.b16 %v93
  %v117 = vunpack.c.l.b16 %v94
  %v118 = vunpack.c.l.b16 %v95
  %v119 = vunpack.c.l.b16 %v96
  %v120 = vunpack.c.l.b16 %v97
  %v121 = vunpack.c.l.b16 %v98
  %v122 = vunpack.c.l.b16 %v99
  %v123 = vpack.c.b16 %v116, %v115
  %v124 = vpack.c.b16 %v118, %v117
  %v125 = vpack.c.b16 %v120, %v119
  %v126 = vpack.c.b16 %v122, %v121
  %vm131 = vcmask 523264
  %v133 = vsel %vm131, %v91, 0
  %135 = vmatprep.subr.bf16.mxu0 0
  %136 = vmatpush1.bf16.msra.mxu0 %v123
  %137 = vmatprep.subr.bf16.mxu0 0
  %138 = vmatpush1.bf16.msra.mxu0 %v124
  %139 = vmatprep.subr.bf16.mxu0 0
  %140 = vmatpush1.bf16.msra.mxu0 %v125
  %141 = vmatprep.subr.bf16.mxu0 0
  %142 = vmatpush1.bf16.msra.mxu0 %v126
  %143 = vmatprep.subr.bf16.mxu0 0
  %144 = vmatpush1.bf16.msra.mxu0 0
  %145 = vmatprep.subr.bf16.mxu0 0
  %146 = vmatpush1.bf16.msra.mxu0 0
  %147 = vmatprep.subr.bf16.mxu0 0
  %148 = vmatpush1.bf16.msra.mxu0 0
  %149 = vmatprep.subr.bf16.mxu0 0
  %150 = vmatpush1.bf16.msra.mxu0 0
  %151 = vmatprep.subr.bf16.mxu0 0
  %152 = vmatpush1.bf16.msra.mxu0 0
  %153 = vmatprep.subr.bf16.mxu0 0
  %154 = vmatpush1.bf16.msra.mxu0 0
  %155 = vmatprep.subr.bf16.mxu0 0
  %156 = vmatpush1.bf16.msra.mxu0 0
  %157 = vmatprep.subr.bf16.mxu0 0
  %158 = vmatpush1.bf16.msra.mxu0 0
  %159 = vmatprep.subr.bf16.mxu0 0
  %160 = vmatpush1.bf16.msra.mxu0 0
  %161 = vmatprep.subr.bf16.mxu0 0
  %162 = vmatpush1.bf16.msra.mxu0 0
  %163 = vmatprep.subr.bf16.mxu0 0
  %164 = vmatpush1.bf16.msra.mxu0 0
  %165 = vmatprep.subr.bf16.mxu0 0
  %166 = vmatpush1.bf16.msra.mxu0 0
  %167 = vmatprep.mubr.bf16.mxu0 0
  %168 = vmatmul.mubr.bf16.gmra.mrb[0].mxu0 %v133
  %v169 = vpop.f32.mrb[0].mxu0
  %v170 = vadd.f32 %v105, %v169
  %v171 = vpop.f32.mrb[0].mxu0
  %v172 = vpop.f32.mrb[0].mxu0
  %v173 = vpop.f32.mrb[0].mxu0
  %174 = vdwg.mxu0
  %v175 = vmax.f32 %v170, 0.0
  %v176 = vld [vmem:[%s5] sm:$0x1]
  %v178 = vlaneseq
  %v179 = vshrl.u32 %v178, 7
  %v180 = vsub.s32 0, %v179
  %v181 = vrot.slane %v176, %v180
  %v183 = vmul.f32 %v175, %v181
  %vm184 = vcmask 261120
  %v185 = vsel %vm184, %v183, 0.0
  %186 = vadd.xlane.f32.xlu0 %v185
  %v187 = vpop.xlane.xlu0 %186
  %v188 = vld [vmem:[#allocation2] sm:$0x1]
  %v190 = vlaneseq
  %v191 = vshrl.u32 %v190, 7
  %v192 = vsub.s32 0, %v191
  %v193 = vrot.slane %v188, %v192
  %v195 = vadd.f32 %v187, %v193
  %v196 = vxor.u32 %v195, 2147483648
  %v197 = vmul.f32 %v196, 1.442695
  %v198 = vpow.pop %v197
  %v199 = vadd.f32 %v198, 1.0
  %v200 = vrcp.pop %v199
  %v201 = vmul.f32 1.0, %v200
  %vm202 = vcmask 7168
  %203 = vst.msk [vmem:[%s7] sm:$0xff] %vm202, %v201
  // Predicated region
  $region30: #{tpu_custom_call.1} parent=0 // pred_check
    _
  $region31: #{tpu_custom_call.1} parent=0 // pred_check_branch
    %205 = sbr.rel (0) target = $region33
  $region32: #{tpu_custom_call.1} parent=0 // pred_region
    _
  $region33: #{tpu_custom_call.1} parent=0 // pred_fallthru
    _
  // Predicated region
  $region34: #{tpu_custom_call.1} parent=0 // pred_check
    _
  $region35: #{tpu_custom_call.1} parent=0 // pred_check_branch
    %207 = sbr.rel (0) target = $region37
  $region36: #{tpu_custom_call.1} parent=0 // pred_region
    _
  $region37: #{tpu_custom_call.1} parent=0 // pred_fallthru
    _

</llo_original>
